<compile_context>
chip_gen: v7x
topology: tpu7x:2x2x1
jax: 0.10.0
libtpu: 0.0.40
codegen_flags: <defaults>
</compile_context>

<pallas_src>
import jax
import jax.numpy as jnp
from jax.experimental import pallas as pl
from jax.experimental.pallas import tpu as pltpu


def _round_up(x: int, m: int) -> int:
    return ((x + m - 1) // m) * m


def siamese_kernel(e1_ref, e2_ref,
                   w1_ref, b1_ref,
                   w2_ref, b2_ref,
                   w3_ref, b3_ref,
                   out_ref):
    # |enc1 - enc2| on the VPU, in the streaming dtype (f32 or bf16): (TB, 128).
    dist = jnp.abs(e1_ref[...] - e2_ref[...])

    # Linear(128 -> 64): contract the feature dim of BOTH operands
    # (w1 is (64, 128) PyTorch layout, dist is (TB, 128)) -> (64, TB) in f32.
    # From here on everything is feature-major: batch lives on the lanes.
    h1 = jax.lax.dot_general(
        w1_ref[...], dist,
        dimension_numbers=(((1,), (1,)), ((), ())),
        preferred_element_type=jnp.float32)
    h1 = jnp.maximum(h1 + b1_ref[...], 0.0)                    # +(64,1) bias, ReLU

    # Linear(64 -> 32): (32, 64) @ (64, TB) -> (32, TB), f32.
    h2 = jnp.dot(w2_ref[...], h1, preferred_element_type=jnp.float32)
    h2 = jnp.maximum(h2 + b2_ref[...], 0.0)                    # +(32,1) bias, ReLU

    # Linear(32 -> 1) on VPU + sublane reduction -> lane-dense (1, TB) row.
    o = jnp.sum(h2 * w3_ref[...], axis=0, keepdims=True) + b3_ref[...]
    out_ref[...] = jax.nn.sigmoid(o).astype(out_ref.dtype)


def _choose_tile(B: int, tile_b: int) -> int:
    """Batch tile: multiple of 128 (lane-dense output), large enough to amortize
    per-step overhead, but small enough that the grid keeps >= ~4 steps so v7x
    can shard across both TensorCores."""
    tb = _round_up(min(max(tile_b, 1), max(B, 1)), 128)
    cap = _round_up(-(-B // 4), 128)          # >= ~4 grid steps when B allows it
    return max(128, min(tb, cap, _round_up(B, 128)))


def siamese_forward(enc1, enc2, params, *, tile_b: int = 2048):
    """enc1, enc2: (B, 128) in f32 or bf16 (use whatever the encoder emits —
    no cast is performed here). Returns (B, 1) float32 probabilities."""
    B, F = enc1.shape
    assert F == 128 and enc2.shape == (B, F)
    assert enc1.dtype == enc2.dtype
    stream_dtype = enc1.dtype

    TB = _choose_tile(B, tile_b)
    grid = (pl.cdiv(B, TB),)                   # ragged last block handled by Pallas

    # Kernel-side parameter layouts (PyTorch (out, in) weights, column biases).
    # w1 matches the streaming dtype so layer 1 runs natively on the MXU
    # (bf16 x bf16 -> f32 accumulate when the encodings are bf16).
    w1 = params["w1"].astype(stream_dtype)                 # (64, 128)
    b1 = params["b1"].astype(jnp.float32).reshape(64, 1)
    w2 = params["w2"].astype(jnp.float32)                  # (32, 64)
    b2 = params["b2"].astype(jnp.float32).reshape(32, 1)
    w3 = params["w3"].astype(jnp.float32).reshape(32, 1)   # (1, 32) -> column
    b3 = params["b3"].astype(jnp.float32).reshape(1, 1)

    const = lambda shape: pl.BlockSpec(shape, lambda i: (0,) * len(shape))

    in_bytes = 2 * B * 128 * jnp.dtype(stream_dtype).itemsize
    weight_bytes = int(sum(4 * a.size for a in (w1, b1, w2, b2, w3, b3)))
    cost = pl.CostEstimate(
        flops=2 * B * (128 * 64 + 64 * 32 + 32),
        transcendentals=B,                                  # one exp per sigmoid
        bytes_accessed=in_bytes + B * 4 + weight_bytes)

    out = pl.pallas_call(
        siamese_kernel,
        out_shape=jax.ShapeDtypeStruct((1, B), jnp.float32),
        grid=grid,
        in_specs=[
            pl.BlockSpec((TB, 128), lambda i: (i, 0)),      # enc1 tile (pipelined)
            pl.BlockSpec((TB, 128), lambda i: (i, 0)),      # enc2 tile (pipelined)
            const(w1.shape), const(b1.shape),               # weights stay VMEM-resident
            const(w2.shape), const(b2.shape),
            const(w3.shape), const(b3.shape),
        ],
        out_specs=pl.BlockSpec((1, TB), lambda i: (0, i)),  # lane-dense output row
        compiler_params=pltpu.CompilerParams(
            dimension_semantics=("parallel",)),             # v7x: both TCs on batch
        cost_estimate=cost,
    )(enc1, enc2, w1, b1, w2, b2, w3, b3)

    return out[0, :B].reshape(B, 1)


def init_params(key):
    """nn.Linear-style init; weights kept in PyTorch (out_features, in_features) layout."""
    ks = jax.random.split(key, 6)

    def lin(kw, kb, fan_in, fan_out):
        bound = 1.0 / float(fan_in) ** 0.5
        w = jax.random.uniform(kw, (fan_out, fan_in), jnp.float32, -bound, bound)
        b = jax.random.uniform(kb, (fan_out,), jnp.float32, -bound, bound)
        return w, b

    w1, b1 = lin(ks[0], ks[1], 128, 64)
    w2, b2 = lin(ks[2], ks[3], 64, 32)
    w3, b3 = lin(ks[4], ks[5], 32, 1)
    return {"w1": w1, "b1": b1, "w2": w2, "b2": b2, "w3": w3, "b3": b3}


def reference_forward(enc1, enc2, p):
    d = jnp.abs(enc1 - enc2)
    h = jnp.maximum(d @ p["w1"].T + p["b1"], 0.0)
    h = jnp.maximum(h @ p["w2"].T + p["b2"], 0.0)
    return jax.nn.sigmoid(h @ p["w3"].T + p["b3"])


if __name__ == "__main__":
    key = jax.random.PRNGKey(0)
    k1, k2, k3, k4, kp = jax.random.split(key, 5)
    params = init_params(kp)

    # 1) Small f32 batch (single partial tile, no padding anywhere).
    B = 8
    enc1 = jax.random.normal(k1, (B, 128), jnp.float32)
    enc2 = jax.random.normal(k2, (B, 128), jnp.float32)
    out = jax.block_until_ready(siamese_forward(enc1, enc2, params))
    ref = reference_forward(enc1, enc2, params)
    assert out.shape == (B, 1)
    assert jnp.allclose(out, ref, atol=1e-5, rtol=1e-5), (out, ref)

    # 2) Ragged f32 multi-tile batch (300 rows -> 3 grid steps, remainder block
    #    handled by Pallas masking instead of jnp.pad).
    B2 = 300
    e1 = jax.random.normal(k3, (B2, 128), jnp.float32)
    e2 = jax.random.normal(k4, (B2, 128), jnp.float32)
    out2 = jax.block_until_ready(siamese_forward(e1, e2, params))
    ref2 = reference_forward(e1, e2, params)
    assert out2.shape == (B2, 1)
    assert jnp.allclose(out2, ref2, atol=1e-5, rtol=1e-5), (out2, ref2)

    # 3) bf16 streaming path (as if the upstream encoder emitted bf16 encodings;
    #    the wrapper performs no casts). Looser tolerance per bf16 inputs.
    e1b = e1.astype(jnp.bfloat16)
    e2b = e2.astype(jnp.bfloat16)
    out3 = jax.block_until_ready(siamese_forward(e1b, e2b, params))
    ref3 = reference_forward(e1b.astype(jnp.float32), e2b.astype(jnp.float32), params)
    assert out3.shape == (B2, 1)
    assert jnp.allclose(out3, ref3, atol=2e-2, rtol=2e-2), (out3, ref3)

    print("KERNEL_OK")
</pallas_src>

<mosaic_0001>
module attributes {stable_mosaic.version = 11 : i64} {
  func.func @siamese_kernel(%arg0: i32, %arg1: memref<128x128xf32, #tpu.memory_space<vmem>>, %arg2: memref<128x128xf32, #tpu.memory_space<vmem>>, %arg3: memref<64x128xf32, #tpu.memory_space<vmem>>, %arg4: memref<64x1xf32, #tpu.memory_space<vmem>>, %arg5: memref<32x64xf32, #tpu.memory_space<vmem>>, %arg6: memref<32x1xf32, #tpu.memory_space<vmem>>, %arg7: memref<32x1xf32, #tpu.memory_space<vmem>>, %arg8: memref<1x1xf32, #tpu.memory_space<vmem>>, %arg9: memref<1x128xf32, #tpu.memory_space<vmem>>) attributes {dimension_semantics = [#tpu.dimension_semantics<parallel>], iteration_bounds = array<i64: 1>, scalar_prefetch = 0 : i64, scratch_operands = 0 : i64, tpu.core_type = #tpu.core_type<tc>, window_params = [{transform_indices = @transform_0, window_bounds = array<i64: 128, 128>}, {transform_indices = @transform_1, window_bounds = array<i64: 128, 128>}, {pipeline_mode = #tpu.pipeline_mode<synchronous>, transform_indices = @transform_2, window_bounds = array<i64: 64, 128>}, {pipeline_mode = #tpu.pipeline_mode<synchronous>, transform_indices = @transform_3, window_bounds = array<i64: 64, 1>}, {pipeline_mode = #tpu.pipeline_mode<synchronous>, transform_indices = @transform_4, window_bounds = array<i64: 32, 64>}, {pipeline_mode = #tpu.pipeline_mode<synchronous>, transform_indices = @transform_5, window_bounds = array<i64: 32, 1>}, {pipeline_mode = #tpu.pipeline_mode<synchronous>, transform_indices = @transform_6, window_bounds = array<i64: 32, 1>}, {pipeline_mode = #tpu.pipeline_mode<synchronous>, transform_indices = @transform_7, window_bounds = array<i64: 1, 1>}, {transform_indices = @transform_8, window_bounds = array<i64: 1, 128>}]} {
    %c0 = arith.constant 0 : index
    %c0_0 = arith.constant 0 : index
    %0 = vector.load %arg1[%c0, %c0_0] : memref<128x128xf32, #tpu.memory_space<vmem>>, vector<128x128xf32>
    %c0_1 = arith.constant 0 : index
    %c0_2 = arith.constant 0 : index
    %1 = vector.load %arg2[%c0_1, %c0_2] : memref<128x128xf32, #tpu.memory_space<vmem>>, vector<128x128xf32>
    %2 = arith.subf %0, %1 : vector<128x128xf32>
    %3 = math.absf %2 : vector<128x128xf32>
    %c0_3 = arith.constant 0 : index
    %c0_4 = arith.constant 0 : index
    %4 = vector.load %arg3[%c0_3, %c0_4] : memref<64x128xf32, #tpu.memory_space<vmem>>, vector<64x128xf32>
    %cst = arith.constant dense<0.000000e+00> : vector<64x128xf32>
    %5 = tpu.matmul %4, %3, %cst {dimension_numbers = #tpu.dot_dimension_numbers<[1], [1], [0], [0], [0, 0, 1, 0], [], []>} : vector<64x128xf32>, vector<128x128xf32>, vector<64x128xf32> -> vector<64x128xf32>
    %c0_5 = arith.constant 0 : index
    %c0_6 = arith.constant 0 : index
    %6 = vector.load %arg4[%c0_5, %c0_6] : memref<64x1xf32, #tpu.memory_space<vmem>>, vector<64x1xf32>
    %7 = vector.broadcast %6 : vector<64x1xf32> to vector<64x128xf32>
    %8 = arith.addf %5, %7 : vector<64x128xf32>
    %cst_7 = arith.constant 0.000000e+00 : f32
    %9 = vector.broadcast %cst_7 : f32 to vector<64x128xf32>
    %10 = arith.maximumf %8, %9 : vector<64x128xf32>
    %c0_8 = arith.constant 0 : index
    %c0_9 = arith.constant 0 : index
    %11 = vector.load %arg5[%c0_8, %c0_9] : memref<32x64xf32, #tpu.memory_space<vmem>>, vector<32x64xf32>
    %cst_10 = arith.constant dense<0.000000e+00> : vector<32x128xf32>
    %12 = tpu.matmul %11, %10, %cst_10 {dimension_numbers = #tpu.dot_dimension_numbers<[1], [0], [0], [1], [0, 0, 1, 1], [], []>} : vector<32x64xf32>, vector<64x128xf32>, vector<32x128xf32> -> vector<32x128xf32>
    %c0_11 = arith.constant 0 : index
    %c0_12 = arith.constant 0 : index
    %13 = vector.load %arg6[%c0_11, %c0_12] : memref<32x1xf32, #tpu.memory_space<vmem>>, vector<32x1xf32>
    %14 = vector.broadcast %13 : vector<32x1xf32> to vector<32x128xf32>
    %15 = arith.addf %12, %14 : vector<32x128xf32>
    %cst_13 = arith.constant 0.000000e+00 : f32
    %16 = vector.broadcast %cst_13 : f32 to vector<32x128xf32>
    %17 = arith.maximumf %15, %16 : vector<32x128xf32>
    %c0_14 = arith.constant 0 : index
    %c0_15 = arith.constant 0 : index
    %18 = vector.load %arg7[%c0_14, %c0_15] : memref<32x1xf32, #tpu.memory_space<vmem>>, vector<32x1xf32>
    %19 = vector.broadcast %18 : vector<32x1xf32> to vector<32x128xf32>
    %20 = arith.mulf %17, %19 : vector<32x128xf32>
    %cst_16 = arith.constant dense<0.000000e+00> : vector<128xf32>
    %21 = vector.multi_reduction <add>, %20, %cst_16 [0] : vector<32x128xf32> to vector<128xf32>
    %22 = vector.shape_cast %21 : vector<128xf32> to vector<1x128xf32>
    %c0_17 = arith.constant 0 : index
    %c0_18 = arith.constant 0 : index
    %23 = vector.load %arg8[%c0_17, %c0_18] : memref<1x1xf32, #tpu.memory_space<vmem>>, vector<1x1xf32>
    %24 = vector.broadcast %23 : vector<1x1xf32> to vector<1x128xf32>
    %25 = arith.addf %22, %24 : vector<1x128xf32>
    %26 = arith.negf %25 : vector<1x128xf32>
    %27 = math.exp %26 : vector<1x128xf32>
    %cst_19 = arith.constant 1.000000e+00 : f32
    %28 = vector.broadcast %cst_19 : f32 to vector<1x128xf32>
    %29 = arith.addf %28, %27 : vector<1x128xf32>
    %30 = arith.divf %28, %29 : vector<1x128xf32>
    %c0_20 = arith.constant 0 : index
    %c0_21 = arith.constant 0 : index
    %31 = vector.load %arg9[%c0_20, %c0_21] : memref<1x128xf32, #tpu.memory_space<vmem>>, vector<1x128xf32>
    tpu.vector_store %arg9[%c0_20, %c0_21], %30 {strides = array<i32>} : memref<1x128xf32, #tpu.memory_space<vmem>>, vector<1x128xf32>,
    return
  }
  func.func @transform_0(%arg0: i32) -> (i32, i32) {
    %c0_i32 = arith.constant 0 : i32
    %c0_i32_0 = arith.constant 0 : i32
    return %arg0, %c0_i32 : i32, i32
  }
  func.func @transform_1(%arg0: i32) -> (i32, i32) {
    %c0_i32 = arith.constant 0 : i32
    %c0_i32_0 = arith.constant 0 : i32
    return %arg0, %c0_i32 : i32, i32
  }
  func.func @transform_2(%arg0: i32) -> (i32, i32) {
    %c0_i32 = arith.constant 0 : i32
    %c0_i32_0 = arith.constant 0 : i32
    %c0_i32_1 = arith.constant 0 : i32
    return %c0_i32, %c0_i32_0 : i32, i32
  }
  func.func @transform_3(%arg0: i32) -> (i32, i32) {
    %c0_i32 = arith.constant 0 : i32
    %c0_i32_0 = arith.constant 0 : i32
    %c0_i32_1 = arith.constant 0 : i32
    return %c0_i32, %c0_i32_0 : i32, i32
  }
  func.func @transform_4(%arg0: i32) -> (i32, i32) {
    %c0_i32 = arith.constant 0 : i32
    %c0_i32_0 = arith.constant 0 : i32
    %c0_i32_1 = arith.constant 0 : i32
    return %c0_i32, %c0_i32_0 : i32, i32
  }
  func.func @transform_5(%arg0: i32) -> (i32, i32) {
    %c0_i32 = arith.constant 0 : i32
    %c0_i32_0 = arith.constant 0 : i32
    %c0_i32_1 = arith.constant 0 : i32
    return %c0_i32, %c0_i32_0 : i32, i32
  }
  func.func @transform_6(%arg0: i32) -> (i32, i32) {
    %c0_i32 = arith.constant 0 : i32
    %c0_i32_0 = arith.constant 0 : i32
    %c0_i32_1 = arith.constant 0 : i32
    return %c0_i32, %c0_i32_0 : i32, i32
  }
  func.func @transform_7(%arg0: i32) -> (i32, i32) {
    %c0_i32 = arith.constant 0 : i32
    %c0_i32_0 = arith.constant 0 : i32
    %c0_i32_1 = arith.constant 0 : i32
    return %c0_i32, %c0_i32_0 : i32, i32
  }
  func.func @transform_8(%arg0: i32) -> (i32, i32) {
    %c0_i32 = arith.constant 0 : i32
    %c0_i32_0 = arith.constant 0 : i32
    return %c0_i32, %arg0 : i32, i32
  }
}

</mosaic_0001>

<llo_original>
// kernel: tpu_custom_call.1
$region0: #{tpu_custom_call.1}
  #allocation0 [shape = 'u32[]', space=smem, size = 0x4, offset = 0x4, fixed_abs, tag = 'smem constant byte address 0x4 - core index']
  #allocation1 [shape = 'u32[144,128]{1,0:T(1,128)}', space=vmem, size = 0x12000, scoped, tag = 'internal scratch']
  #allocation2 [shape = 'f32[1,1]{1,0:T(1,128)S(1)}', space=vmem, size = 0x200, scoped, tag = 'scoped memory for tpu_custom_call.1']
  %s0 = inlined_call_operand.vmem [shape: f32[8,128], index: 0, kind: input, shape index: {}]
  %s1 = inlined_call_operand.vmem [shape: f32[8,128], index: 1, kind: input, shape index: {}]
  %s2 = inlined_call_operand.vmem [shape: f32[64,128], index: 2, kind: input, shape index: {}]
  %s3 = inlined_call_operand.vmem [shape: f32[64,1], index: 3, kind: input, shape index: {}]
  %s4 = inlined_call_operand.vmem [shape: f32[32,64], index: 4, kind: input, shape index: {}]
  %s5 = inlined_call_operand.vmem [shape: f32[32,1], index: 5, kind: input, shape index: {}]
  %s6 = inlined_call_operand.vmem [shape: f32[32,1], index: 6, kind: input, shape index: {}]
  %s7 = inlined_call_operand.<no memory space> [shape: f32[1,1], index: 7, kind: input, shape index: {}]
  %s8 = inlined_call_operand.hbm [shape: f32[1,8], index: 8, kind: output, shape index: {}]
  %s9 = sld [smem:[#allocation0]]
  $region42: #{tpu_custom_call.1} parent=0
    _
  %s11 = ssub.s32 1, %s9
  %s12 = scalar_select 0, %s11, %s9
  %v13 = vstv %s7
  %14 = vst [vmem:[#allocation2] sm:$0x1] %v13
  $region1: #{tpu_custom_call.1} parent=0
    #allocation3 [shape = 'u8[512]{0}', space=vmem, size = 0x400, scoped, tag = 'output window, operand 0, single buffered']
    #allocation4 [shape = 's32[1]{0}', space=sflag, size = 0x4, scoped, tag = 'scoped memory for tpu_custom_call.1']
    %15 = vsyncpa [#allocation4], 0
    // Predicated region
    $region2: #{tpu_custom_call.1} parent=1 // pred_check
      _
    $region3: #{tpu_custom_call.1} parent=1 // pred_check_branch
      %17 = sbr.rel (0) target = $region5
    $region4: #{tpu_custom_call.1} parent=1 // pred_region
      _
    $region5: #{tpu_custom_call.1} parent=1 // pred_fallthru
      _
    // Predicated region
    $region6: #{tpu_custom_call.1} parent=1 // pred_check
      _
    $region7: #{tpu_custom_call.1} parent=1 // pred_check_branch
      %19 = sbr.rel (0) target = $region9
    $region8: #{tpu_custom_call.1} parent=1 // pred_region
      _
    $region9: #{tpu_custom_call.1} parent=1 // pred_fallthru
      _
    // Predicated region
    $region10: #{tpu_custom_call.1} parent=1 // pred_check
      _
    $region11: #{tpu_custom_call.1} parent=1 // pred_check_branch
      %21 = sbr.rel (0) target = $region13
    $region12: #{tpu_custom_call.1} parent=1 // pred_region
      _
    $region13: #{tpu_custom_call.1} parent=1 // pred_fallthru
      _
    // Predicated region
    $region14: #{tpu_custom_call.1} parent=1 // pred_check
      _
    $region15: #{tpu_custom_call.1} parent=1 // pred_check_branch
      %23 = sbr.rel (0) target = $region17
    $region16: #{tpu_custom_call.1} parent=1 // pred_region
      _
    $region17: #{tpu_custom_call.1} parent=1 // pred_fallthru
      _
    // Predicated region
    $region18: #{tpu_custom_call.1} parent=1 // pred_check
      _
    $region19: #{tpu_custom_call.1} parent=1 // pred_check_branch
      %25 = sbr.rel (0) target = $region21
    $region20: #{tpu_custom_call.1} parent=1 // pred_region
      _
    $region21: #{tpu_custom_call.1} parent=1 // pred_fallthru
      _
    // Predicated region
    $region22: #{tpu_custom_call.1} parent=1 // pred_check
      _
    $region23: #{tpu_custom_call.1} parent=1 // pred_check_branch
      %27 = sbr.rel (0) target = $region25
    $region24: #{tpu_custom_call.1} parent=1 // pred_region
      _
    $region25: #{tpu_custom_call.1} parent=1 // pred_fallthru
      _
    // Predicated region
    $region26: #{tpu_custom_call.1} parent=1 // pred_check
      _
    $region27: #{tpu_custom_call.1} parent=1 // pred_check_branch
      %29 = sbr.rel (0) target = $region29
    $region28: #{tpu_custom_call.1} parent=1 // pred_region
      _
    $region29: #{tpu_custom_call.1} parent=1 // pred_fallthru
      _
    // Predicated region
    $region30: #{tpu_custom_call.1} parent=1 // pred_check
      _
    $region31: #{tpu_custom_call.1} parent=1 // pred_check_branch
      %31 = sbr.rel (0) target = $region33
    $region32: #{tpu_custom_call.1} parent=1 // pred_region
      _
    $region33: #{tpu_custom_call.1} parent=1 // pred_fallthru
      _
    %v32 = vld [vmem:[%s0] sm:$0xff]
    %v33 = vld [vmem:[%s0 + $0x8] sm:$0xff]
    %v34 = vld [vmem:[%s0 + $0x10] sm:$0xff]
    %v35 = vld [vmem:[%s0 + $0x18] sm:$0xff]
    %v36 = vld [vmem:[%s0 + $0x20] sm:$0xff]
    %v37 = vld [vmem:[%s0 + $0x28] sm:$0xff]
    %v38 = vld [vmem:[%s0 + $0x30] sm:$0xff]
    %v39 = vld [vmem:[%s0 + $0x38] sm:$0xff]
    %v40 = vld [vmem:[%s0 + $0x40] sm:$0xff]
    %v41 = vld [vmem:[%s0 + $0x48] sm:$0xff]
    %v42 = vld [vmem:[%s0 + $0x50] sm:$0xff]
    %v43 = vld [vmem:[%s0 + $0x58] sm:$0xff]
    %v44 = vld [vmem:[%s0 + $0x60] sm:$0xff]
    %v45 = vld [vmem:[%s0 + $0x68] sm:$0xff]
    %v46 = vld [vmem:[%s0 + $0x70] sm:$0xff]
    %v47 = vld [vmem:[%s0 + $0x78] sm:$0xff]
    %v48 = vld [vmem:[%s1] sm:$0xff]
    %v49 = vld [vmem:[%s1 + $0x8] sm:$0xff]
    %v50 = vld [vmem:[%s1 + $0x10] sm:$0xff]
    %v51 = vld [vmem:[%s1 + $0x18] sm:$0xff]
    %v52 = vld [vmem:[%s1 + $0x20] sm:$0xff]
    %v53 = vld [vmem:[%s1 + $0x28] sm:$0xff]
    %v54 = vld [vmem:[%s1 + $0x30] sm:$0xff]
    %v55 = vld [vmem:[%s1 + $0x38] sm:$0xff]
    %v56 = vld [vmem:[%s1 + $0x40] sm:$0xff]
    %v57 = vld [vmem:[%s1 + $0x48] sm:$0xff]
    %v58 = vld [vmem:[%s1 + $0x50] sm:$0xff]
    %v59 = vld [vmem:[%s1 + $0x58] sm:$0xff]
    %v60 = vld [vmem:[%s1 + $0x60] sm:$0xff]
    %v61 = vld [vmem:[%s1 + $0x68] sm:$0xff]
    %v62 = vld [vmem:[%s1 + $0x70] sm:$0xff]
    %v63 = vld [vmem:[%s1 + $0x78] sm:$0xff]
    %v64 = vsub.f32 %v32, %v48
    %v65 = vsub.f32 %v33, %v49
    %v66 = vsub.f32 %v34, %v50
    %v67 = vsub.f32 %v35, %v51
    %v68 = vsub.f32 %v36, %v52
    %v69 = vsub.f32 %v37, %v53
    %v70 = vsub.f32 %v38, %v54
    %v71 = vsub.f32 %v39, %v55
    %v72 = vsub.f32 %v40, %v56
    %v73 = vsub.f32 %v41, %v57
    %v74 = vsub.f32 %v42, %v58
    %v75 = vsub.f32 %v43, %v59
    %v76 = vsub.f32 %v44, %v60
    %v77 = vsub.f32 %v45, %v61
    %v78 = vsub.f32 %v46, %v62
    %v79 = vsub.f32 %v47, %v63
    %v80 = vand.u32 2147483647, %v64
    %v81 = vand.u32 2147483647, %v65
    %v82 = vand.u32 2147483647, %v66
    %v83 = vand.u32 2147483647, %v67
    %v84 = vand.u32 2147483647, %v68
    %v85 = vand.u32 2147483647, %v69
    %v86 = vand.u32 2147483647, %v70
    %v87 = vand.u32 2147483647, %v71
    %v88 = vand.u32 2147483647, %v72
    %v89 = vand.u32 2147483647, %v73
    %v90 = vand.u32 2147483647, %v74
    %v91 = vand.u32 2147483647, %v75
    %v92 = vand.u32 2147483647, %v76
    %v93 = vand.u32 2147483647, %v77
    %v94 = vand.u32 2147483647, %v78
    %v95 = vand.u32 2147483647, %v79
    %v96 = vld [vmem:[%s2] sm:$0xff]
    %v97 = vld [vmem:[%s2 + $0x8] sm:$0xff]
    %v98 = vld [vmem:[%s2 + $0x10] sm:$0xff]
    %v99 = vld [vmem:[%s2 + $0x18] sm:$0xff]
    %v100 = vld [vmem:[%s2 + $0x20] sm:$0xff]
    %v101 = vld [vmem:[%s2 + $0x28] sm:$0xff]
    %v102 = vld [vmem:[%s2 + $0x30] sm:$0xff]
    %v103 = vld [vmem:[%s2 + $0x38] sm:$0xff]
    %v104 = vld [vmem:[%s3] sm:$0xff]
    %v105 = vld [vmem:[%s3 + $0x8] sm:$0xff]
    %v106 = vld [vmem:[%s3 + $0x10] sm:$0xff]
    %v107 = vld [vmem:[%s3 + $0x18] sm:$0xff]
    %v108 = vld [vmem:[%s3 + $0x20] sm:$0xff]
    %v109 = vld [vmem:[%s3 + $0x28] sm:$0xff]
    %v110 = vld [vmem:[%s3 + $0x30] sm:$0xff]
    %v111 = vld [vmem:[%s3 + $0x38] sm:$0xff]
    %113 = vset.pattern.permute.xlu0 0
    %114 = vperm.xlu0 %113, %v104
    %v115 = vpop.permute.xlu0 %114
    %118 = vset.pattern.permute.xlu0 0
    %119 = vperm.xlu0 %118, %v105
    %v120 = vpop.permute.xlu0 %119
    %123 = vset.pattern.permute.xlu0 0
    %124 = vperm.xlu0 %123, %v106
    %v125 = vpop.permute.xlu0 %124
    %128 = vset.pattern.permute.xlu0 0
    %129 = vperm.xlu0 %128, %v107
    %v130 = vpop.permute.xlu0 %129
    %133 = vset.pattern.permute.xlu0 0
    %134 = vperm.xlu0 %133, %v108
    %v135 = vpop.permute.xlu0 %134
    %138 = vset.pattern.permute.xlu0 0
    %139 = vperm.xlu0 %138, %v109
    %v140 = vpop.permute.xlu0 %139
    %143 = vset.pattern.permute.xlu0 0
    %144 = vperm.xlu0 %143, %v110
    %v145 = vpop.permute.xlu0 %144
    %148 = vset.pattern.permute.xlu0 0
    %149 = vperm.xlu0 %148, %v111
    %v150 = vpop.permute.xlu0 %149
    %152 = vmatprep.subr.mxu0 0.0
    %153 = vmatpush1.xpose.msra.mxu0 %v80
    %154 = vmatprep.subr.mxu0 0.0
    %155 = vmatpush1.xpose.msra.mxu0 %v81
    %156 = vmatprep.subr.mxu0 0.0
    %157 = vmatpush1.xpose.msra.mxu0 %v82
    %158 = vmatprep.subr.mxu0 0.0
    %159 = vmatpush1.xpose.msra.mxu0 %v83
    %160 = vmatprep.subr.mxu0 0.0
    %161 = vmatpush1.xpose.msra.mxu0 %v84
    %162 = vmatprep.subr.mxu0 0.0
    %163 = vmatpush1.xpose.msra.mxu0 %v85
    %164 = vmatprep.subr.mxu0 0.0
    %165 = vmatpush1.xpose.msra.mxu0 %v86
    %166 = vmatprep.subr.mxu0 0.0
    %167 = vmatpush1.xpose.msra.mxu0 %v87
    %168 = vmatprep.subr.mxu0 0.0
    %169 = vmatpush1.xpose.msra.mxu0 %v88
    %170 = vmatprep.subr.mxu0 0.0
    %171 = vmatpush1.xpose.msra.mxu0 %v89
    %172 = vmatprep.subr.mxu0 0.0
    %173 = vmatpush1.xpose.msra.mxu0 %v90
    %174 = vmatprep.subr.mxu0 0.0
    %175 = vmatpush1.xpose.msra.mxu0 %v91
    %176 = vmatprep.subr.mxu0 0.0
    %177 = vmatpush1.xpose.msra.mxu0 %v92
    %178 = vmatprep.subr.mxu0 0.0
    %179 = vmatpush1.xpose.msra.mxu0 %v93
    %180 = vmatprep.subr.mxu0 0.0
    %181 = vmatpush1.xpose.msra.mxu0 %v94
    %182 = vmatprep.subr.mxu0 0.0
    %183 = vmatpush1.xpose.msra.mxu0 %v95
    %184 = vmatprep.subr.mxu0 0.0
    %185 = vmatpush1.xpose.msra.mxu0 0.0
    %186 = vmatprep.subr.mxu0 0.0
    %187 = vmatpush1.xpose.msra.mxu0 0.0
    %188 = vmatprep.subr.mxu0 0.0
    %189 = vmatpush1.xpose.msra.mxu0 0.0
    %190 = vmatprep.subr.mxu0 0.0
    %191 = vmatpush1.xpose.msra.mxu0 0.0
    %192 = vmatprep.subr.mxu0 0.0
    %193 = vmatpush1.xpose.msra.mxu0 0.0
    %194 = vmatprep.subr.mxu0 0.0
    %195 = vmatpush1.xpose.msra.mxu0 0.0
    %196 = vmatprep.subr.mxu0 0.0
    %197 = vmatpush1.xpose.msra.mxu0 0.0
    %198 = vmatprep.subr.mxu0 0.0
    %199 = vmatpush1.xpose.msra.mxu0 0.0
    %200 = vmatprep.subr.mxu0 0.0
    %201 = vmatpush1.xpose.msra.mxu0 0.0
    %202 = vmatprep.subr.mxu0 0.0
    %203 = vmatpush1.xpose.msra.mxu0 0.0
    %204 = vmatprep.subr.mxu0 0.0
    %205 = vmatpush1.xpose.msra.mxu0 0.0
    %206 = vmatprep.subr.mxu0 0.0
    %207 = vmatpush1.xpose.msra.mxu0 0.0
    %208 = vmatprep.subr.mxu0 0.0
    %209 = vmatpush1.xpose.msra.mxu0 0.0
    %210 = vmatprep.subr.mxu0 0.0
    %211 = vmatpush1.xpose.msra.mxu0 0.0
    %212 = vmatprep.subr.mxu0 0.0
    %213 = vmatpush1.xpose.msra.mxu0 0.0
    %214 = vmatprep.subr.mxu0 0.0
    %215 = vmatpush1.xpose.msra.mxu0 0.0
    %216 = vmatprep.mubr.f32.mxu0 0.0
    %217 = vmatmul.mubr.f32.gmra.mrb[0].mxu0 %v96
    %v218 = vpop.f32.mrb[0].mxu0
    %v219 = vadd.f32 %v115, %v218
    %v220 = vpop.f32.mrb[0].mxu0
    %221 = vmatprep.mubr.f32.mxu0 0.0
    %222 = vmatmul.mubr.f32.gmra.mrb[0].mxu0 %v97
    %v223 = vpop.f32.mrb[0].mxu0
    %v224 = vadd.f32 %v120, %v223
    %v225 = vpop.f32.mrb[0].mxu0
    %226 = vmatprep.mubr.f32.mxu0 0.0
    %227 = vmatmul.mubr.f32.gmra.mrb[0].mxu0 %v98
    %v228 = vpop.f32.mrb[0].mxu0
    %v229 = vadd.f32 %v125, %v228
    %v230 = vpop.f32.mrb[0].mxu0
    %231 = vmatprep.mubr.f32.mxu0 0.0
    %232 = vmatmul.mubr.f32.gmra.mrb[0].mxu0 %v99
    %v233 = vpop.f32.mrb[0].mxu0
    %v234 = vadd.f32 %v130, %v233
    %v235 = vpop.f32.mrb[0].mxu0
    %236 = vmatprep.mubr.f32.mxu0 0.0
    %237 = vmatmul.mubr.f32.gmra.mrb[0].mxu0 %v100
    %v238 = vpop.f32.mrb[0].mxu0
    %v239 = vadd.f32 %v135, %v238
    %v240 = vpop.f32.mrb[0].mxu0
    %241 = vmatprep.mubr.f32.mxu0 0.0
    %242 = vmatmul.mubr.f32.gmra.mrb[0].mxu0 %v101
    %v243 = vpop.f32.mrb[0].mxu0
    %v244 = vadd.f32 %v140, %v243
    %v245 = vpop.f32.mrb[0].mxu0
    %246 = vmatprep.mubr.f32.mxu0 0.0
    %247 = vmatmul.mubr.f32.gmra.mrb[0].mxu0 %v102
    %v248 = vpop.f32.mrb[0].mxu0
    %v249 = vadd.f32 %v145, %v248
    %v250 = vpop.f32.mrb[0].mxu0
    %251 = vmatprep.mubr.f32.mxu0 0.0
    %252 = vmatmul.mubr.f32.gmra.mrb[0].mxu0 %v103
    %v253 = vpop.f32.mrb[0].mxu0
    %v254 = vadd.f32 %v150, %v253
    %v255 = vpop.f32.mrb[0].mxu0
    %256 = vdwg.mxu0
    %v257 = vmax.f32 %v219, 0.0
    %v258 = vmax.f32 %v224, 0.0
    %v259 = vmax.f32 %v229, 0.0
    %v260 = vmax.f32 %v234, 0.0
    %v261 = vmax.f32 %v239, 0.0
    %v262 = vmax.f32 %v244, 0.0
    %v263 = vmax.f32 %v249, 0.0
    %v264 = vmax.f32 %v254, 0.0
    %v265 = vld [vmem:[%s4] sm:$0xff]
    %v266 = vld [vmem:[%s4 + $0x8] sm:$0xff]
    %v267 = vld [vmem:[%s4 + $0x10] sm:$0xff]
    %v268 = vld [vmem:[%s4 + $0x18] sm:$0xff]
    %v269 = vld [vmem:[%s5] sm:$0xff]
    %v270 = vld [vmem:[%s5 + $0x8] sm:$0xff]
    %v271 = vld [vmem:[%s5 + $0x10] sm:$0xff]
    %v272 = vld [vmem:[%s5 + $0x18] sm:$0xff]
    %274 = vset.pattern.permute.xlu0 0
    %275 = vperm.xlu0 %274, %v269
    %v276 = vpop.permute.xlu0 %275
    %279 = vset.pattern.permute.xlu0 0
    %280 = vperm.xlu0 %279, %v270
    %v281 = vpop.permute.xlu0 %280
    %284 = vset.pattern.permute.xlu0 0
    %285 = vperm.xlu0 %284, %v271
    %v286 = vpop.permute.xlu0 %285
    %289 = vset.pattern.permute.xlu0 0
    %290 = vperm.xlu0 %289, %v272
    %v291 = vpop.permute.xlu0 %290
    %vm293 = vcmask 523264
    %v295 = vsel %vm293, %v265, 0
    %v298 = vsel %vm293, %v266, 0
    %v301 = vsel %vm293, %v267, 0
    %v304 = vsel %vm293, %v268, 0
    %306 = vmatprep.subr.mxu0 0.0
    %307 = vmatpush1.msra.mxu0 %v257
    %308 = vmatprep.subr.mxu0 0.0
    %309 = vmatpush1.msra.mxu0 %v258
    %310 = vmatprep.subr.mxu0 0.0
    %311 = vmatpush1.msra.mxu0 %v259
    %312 = vmatprep.subr.mxu0 0.0
    %313 = vmatpush1.msra.mxu0 %v260
    %314 = vmatprep.subr.mxu0 0.0
    %315 = vmatpush1.msra.mxu0 %v261
    %316 = vmatprep.subr.mxu0 0.0
    %317 = vmatpush1.msra.mxu0 %v262
    %318 = vmatprep.subr.mxu0 0.0
    %319 = vmatpush1.msra.mxu0 %v263
    %320 = vmatprep.subr.mxu0 0.0
    %321 = vmatpush1.msra.mxu0 %v264
    %322 = vmatprep.subr.mxu0 0.0
    %323 = vmatpush1.msra.mxu0 0.0
    %324 = vmatprep.subr.mxu0 0.0
    %325 = vmatpush1.msra.mxu0 0.0
    %326 = vmatprep.subr.mxu0 0.0
    %327 = vmatpush1.msra.mxu0 0.0
    %328 = vmatprep.subr.mxu0 0.0
    %329 = vmatpush1.msra.mxu0 0.0
    %330 = vmatprep.subr.mxu0 0.0
    %331 = vmatpush1.msra.mxu0 0.0
    %332 = vmatprep.subr.mxu0 0.0
    %333 = vmatpush1.msra.mxu0 0.0
    %334 = vmatprep.subr.mxu0 0.0
    %335 = vmatpush1.msra.mxu0 0.0
    %336 = vmatprep.subr.mxu0 0.0
    %337 = vmatpush1.msra.mxu0 0.0
    %338 = vmatprep.subr.mxu0 0.0
    %339 = vmatpush1.msra.mxu0 0.0
    %340 = vmatprep.subr.mxu0 0.0
    %341 = vmatpush1.msra.mxu0 0.0
    %342 = vmatprep.subr.mxu0 0.0
    %343 = vmatpush1.msra.mxu0 0.0
    %344 = vmatprep.subr.mxu0 0.0
    %345 = vmatpush1.msra.mxu0 0.0
    %346 = vmatprep.subr.mxu0 0.0
    %347 = vmatpush1.msra.mxu0 0.0
    %348 = vmatprep.subr.mxu0 0.0
    %349 = vmatpush1.msra.mxu0 0.0
    %350 = vmatprep.subr.mxu0 0.0
    %351 = vmatpush1.msra.mxu0 0.0
    %352 = vmatprep.subr.mxu0 0.0
    %353 = vmatpush1.msra.mxu0 0.0
    %354 = vmatprep.subr.mxu0 0.0
    %355 = vmatpush1.msra.mxu0 0.0
    %356 = vmatprep.subr.mxu0 0.0
    %357 = vmatpush1.msra.mxu0 0.0
    %358 = vmatprep.subr.mxu0 0.0
    %359 = vmatpush1.msra.mxu0 0.0
    %360 = vmatprep.subr.mxu0 0.0
    %361 = vmatpush1.msra.mxu0 0.0
    %362 = vmatprep.subr.mxu0 0.0
    %363 = vmatpush1.msra.mxu0 0.0
    %364 = vmatprep.subr.mxu0 0.0
    %365 = vmatpush1.msra.mxu0 0.0
    %366 = vmatprep.subr.mxu0 0.0
    %367 = vmatpush1.msra.mxu0 0.0
    %368 = vmatprep.subr.mxu0 0.0
    %369 = vmatpush1.msra.mxu0 0.0
    %370 = vmatprep.mubr.f32.mxu0 0.0
    %371 = vmatmul.mubr.f32.gmra.mrb[0].mxu0 %v295
    %v372 = vpop.f32.mrb[0].mxu0
    %v373 = vadd.f32 %v276, %v372
    %v374 = vpop.f32.mrb[0].mxu0
    %375 = vmatprep.mubr.f32.mxu0 0.0
    %376 = vmatmul.mubr.f32.gmra.mrb[0].mxu0 %v298
    %v377 = vpop.f32.mrb[0].mxu0
    %v378 = vadd.f32 %v281, %v377
    %v379 = vpop.f32.mrb[0].mxu0
    %380 = vmatprep.mubr.f32.mxu0 0.0
    %381 = vmatmul.mubr.f32.gmra.mrb[0].mxu0 %v301
    %v382 = vpop.f32.mrb[0].mxu0
    %v383 = vadd.f32 %v286, %v382
    %v384 = vpop.f32.mrb[0].mxu0
    %385 = vmatprep.mubr.f32.mxu0 0.0
    %386 = vmatmul.mubr.f32.gmra.mrb[0].mxu0 %v304
    %v387 = vpop.f32.mrb[0].mxu0
    %v388 = vadd.f32 %v291, %v387
    %v389 = vpop.f32.mrb[0].mxu0
    %390 = vdwg.mxu0
    %v391 = vmax.f32 %v373, 0.0
    %v392 = vmax.f32 %v378, 0.0
    %v393 = vmax.f32 %v383, 0.0
    %v394 = vmax.f32 %v388, 0.0
    %v395 = vld [vmem:[%s6] sm:$0xff]
    %v396 = vld [vmem:[%s6 + $0x8] sm:$0xff]
    %v397 = vld [vmem:[%s6 + $0x10] sm:$0xff]
    %v398 = vld [vmem:[%s6 + $0x18] sm:$0xff]
    %400 = vset.pattern.permute.xlu0 0
    %401 = vperm.xlu0 %400, %v395
    %v402 = vpop.permute.xlu0 %401
    %405 = vset.pattern.permute.xlu0 0
    %406 = vperm.xlu0 %405, %v396
    %v407 = vpop.permute.xlu0 %406
    %410 = vset.pattern.permute.xlu0 0
    %411 = vperm.xlu0 %410, %v397
    %v412 = vpop.permute.xlu0 %411
    %415 = vset.pattern.permute.xlu0 0
    %416 = vperm.xlu0 %415, %v398
    %v417 = vpop.permute.xlu0 %416
    %v419 = vmul.f32 %v391, %v402
    %v420 = vmul.f32 %v392, %v407
    %v421 = vmul.f32 %v393, %v412
    %v422 = vmul.f32 %v394, %v417
    %v423 = vadd.f32 %v419, %v420
    %v424 = vadd.f32 %v423, %v421
    %v425 = vadd.f32 %v424, %v422
    %v426 = vrot.slane %v425, 4
    %v427 = vadd.f32 %v425, %v426
    %v428 = vrot.slane %v427, 2
    %v429 = vadd.f32 %v427, %v428
    %v430 = vrot.slane %v429, 1
    %v431 = vadd.f32 %v429, %v430
    %v432 = vld [vmem:[#allocation2] sm:$0x1]
    %434 = vset.pattern.permute.xlu0 0
    %435 = vperm.xlu0 %434, %v432
    %v436 = vpop.permute.xlu0 %435
    %v438 = vlaneseq
    %v439 = vshrl.u32 %v438, 7
    %v440 = vsub.s32 0, %v439
    %v441 = vrot.slane %v436, %v440
    %v442 = vadd.f32 %v431, %v441
    %v443 = vxor.u32 %v442, 2147483648
    %v444 = vmul.f32 %v443, 1.442695
    %v445 = vpow.pop %v444
    %v446 = vadd.f32 %v445, 1.0
    %v447 = vrcp.pop %v446
    %v448 = vmul.f32 1.0, %v447
    %449 = vst [vmem:[#allocation3] sm:$0x1] %v448
    // Predicated region
    $region34: #{tpu_custom_call.1} parent=1 // pred_check
      _
    $region35: #{tpu_custom_call.1} parent=1 // pred_check_branch
      %451 = sbr.rel (0) target = $region37
    $region36: #{tpu_custom_call.1} parent=1 // pred_region
      %s453 = ssub.s32 16, 16
      %454 = vsyncadd [#allocation4], %s453
      %s456 = sshll.u32 [#allocation3], 4
      %s457 = int_to_ptr.vmem [resolvable:$true] %s456
      %459 = dma.vmem_to_hbm [thread:$0]  %s457, 16, %s8, [#allocation4]
    $region37: #{tpu_custom_call.1} parent=1 // pred_fallthru
      _
    // Predicated region
    $region38: #{tpu_custom_call.1} parent=1 // pred_check
      _
    $region39: #{tpu_custom_call.1} parent=1 // pred_check_branch
      %461 = sbr.rel (0) target = $region41
    $region40: #{tpu_custom_call.1} parent=1 // pred_region
      %462 = dma.done [#allocation4], 16
    $region41: #{tpu_custom_call.1} parent=1 // pred_fallthru
      _
    %463 = vsyncpa [#allocation4], 1

</llo_original>
